<compile_context>
chip_gen: v5e
topology: v5e:2x2
jax: 0.10.0
libtpu: 0.0.40
codegen_flags: <defaults>
</compile_context>

<pallas_src>
import functools
import warnings

import jax
import jax.numpy as jnp
import numpy as np
from jax.experimental import pallas as pl
from jax.experimental.pallas import tpu as pltpu


# ---------------------------------------------------------------------------
# Tiling / VMEM helpers
# ---------------------------------------------------------------------------

_LANES = 128
_MIN_TOTAL_STEPS = 4           # keep >= 4 grid steps so the DMA pipeline can overlap
_TILE_BUDGET_BYTES = 6 << 20   # per-step (single-buffered) block bytes; ~2x with double buffering


def _round_down(x, q):
    return (x // q) * q


def _ceil_div(a, b):
    return -(-a // b)


def _sublane_pack(itemsize):
    # sublane packing: 8 rows (f32), 16 (bf16/f16), 32 (int8/fp8)
    return max(8, 32 // max(1, itemsize))


def _vmem_capacity_bytes():
    try:
        return int(pltpu.get_tpu_info().vmem_capacity_bytes)
    except Exception:
        # Interpret mode / older jax: assume the smallest per-core VMEM (v7x).
        return 64 << 20


def _mosaic_params(step_bytes):
    """Generation-aware VMEM limit: >= double-buffered footprint, <= half physical VMEM."""
    cap = _vmem_capacity_bytes()
    limit = min(max(2 * step_bytes + (4 << 20), 32 << 20), max(cap // 2, 32 << 20))
    return pltpu.CompilerParams(
        dimension_semantics=("parallel", "parallel"),
        vmem_limit_bytes=int(limit))


def _pick_rows_tile(rows, n, bytes_per_row):
    """Row tile (multiple of 8 sublanes) for the flattened (rows, 128) slab view."""
    if rows <= 8:
        return rows                                       # full extent (exempt from 8-row rule)
    r_budget = max(8, _round_down(_TILE_BUDGET_BYTES // bytes_per_row, 8))
    want_tiles = max(1, _ceil_div(_MIN_TOTAL_STEPS, max(1, n)))
    r_steps = _round_down(rows // want_tiles, 8)
    r = min(r_budget, max(64, r_steps))
    if r >= rows:
        return rows
    # Prefer a tile that divides `rows` exactly (avoids a ragged, masked last block).
    best, t = 0, 8
    while t <= r:
        if rows % t == 0:
            best = t
        t += 8
    if best >= max(8, r // 2):
        return best
    return max(8, r)


def _pick_hw_tile(hw, n, bytes_per_lane):
    """Lane tile for the fallback (N, C, H*W) layout."""
    if hw % _LANES != 0:
        return hw                                         # full extent (exempt from lane rule)
    cap = max(_LANES, _round_down(_TILE_BUDGET_BYTES // bytes_per_lane, _LANES))
    want_tiles = max(1, _ceil_div(_MIN_TOTAL_STEPS, max(1, n)))
    cap = min(cap, max(_LANES, _round_down(hw // want_tiles, _LANES)), hw)
    best, t = _LANES, _LANES
    while t <= cap:
        if hw % t == 0:
            best = t
        t += _LANES
    return best


# ---------------------------------------------------------------------------
# Kernels
# ---------------------------------------------------------------------------

def _shift_kernel_aligned(cache_ref, x_ref, out_ref):
    # cache_ref: (1, 1, rt, 128)  lower-half channel slab of the previous frame
    # x_ref:     (1, 1, rt, 128)  upper-half channel slab of the current frame
    # out_ref:   (1, 2, rt, 128)
    # Pure copies; the channel selection already happened in the BlockSpecs.
    out_ref[:, 0:1, :, :] = cache_ref[...]
    out_ref[:, 1:2, :, :] = x_ref[...]


def _shift_kernel_donated(cache_hbm_ref, x_ref, out_ref):
    # `out` is aliased to the (donated) cache buffer: the lower channel half is already
    # in place in HBM, so only the upper-half slab is written.
    del cache_hbm_ref
    out_ref[...] = x_ref[...]


def _shift_kernel_fallback(cache_ref, x_ref, out_ref, *, fold):
    # Unaligned channel counts: split in-kernel.  cache_ref only carries the first
    # ceil(fold/pack)*pack channels (or all channels when that rounds past C).
    out_ref[:, :fold, :] = cache_ref[:, :fold, :]
    out_ref[:, fold:, :] = x_ref[:, fold:, :]


# ---------------------------------------------------------------------------
# pallas_call builders
# ---------------------------------------------------------------------------

def _call_aligned(cache, x, n, hw, fold, donate):
    itemsize = jnp.dtype(x.dtype).itemsize
    s = fold * hw                      # elements per channel-half slab (contiguous in HBM)
    rows = s // _LANES
    cache4 = cache.reshape(n, 2, rows, _LANES)   # free, metadata-only reshape
    x4 = x.reshape(n, 2, rows, _LANES)

    bytes_per_row = (2 if donate else 4) * _LANES * itemsize
    rt = _pick_rows_tile(rows, n, bytes_per_row)
    grid = (n, pl.cdiv(rows, rt))
    step_bytes = bytes_per_row * rt
    params = _mosaic_params(step_bytes)
    out_shape = jax.ShapeDtypeStruct((n, 2, rows, _LANES), x.dtype)

    if donate:
        # In-place: output aliases the cache buffer; only x's upper slab is moved.
        out4 = pl.pallas_call(
            _shift_kernel_donated,
            out_shape=out_shape,
            grid=grid,
            in_specs=[
                pl.BlockSpec(memory_space=pl.ANY),                             # cache (aliased)
                pl.BlockSpec((1, 1, rt, _LANES), lambda i, j: (i, 1, j, 0)),   # x upper slab
            ],
            out_specs=pl.BlockSpec((1, 1, rt, _LANES), lambda i, j: (i, 1, j, 0)),
            input_output_aliases={0: 0},
            compiler_params=params,
        )(cache4, x4)
    else:
        out4 = pl.pallas_call(
            _shift_kernel_aligned,
            out_shape=out_shape,
            grid=grid,
            in_specs=[
                pl.BlockSpec((1, 1, rt, _LANES), lambda i, j: (i, 0, j, 0)),   # cache lower slab
                pl.BlockSpec((1, 1, rt, _LANES), lambda i, j: (i, 1, j, 0)),   # x upper slab
            ],
            out_specs=pl.BlockSpec((1, 2, rt, _LANES), lambda i, j: (i, 0, j, 0)),
            compiler_params=params,
        )(cache4, x4)
    return out4.reshape(x.shape)


def _call_fallback(cache, x, n, c, hw, fold):
    itemsize = jnp.dtype(x.dtype).itemsize
    pack = _sublane_pack(itemsize)
    cache_f = cache.reshape(n, c, hw)
    x_f = x.reshape(n, c, hw)

    c_cache = _ceil_div(fold, pack) * pack      # trim cache read to the needed channels
    if c_cache >= c:
        c_cache = c                              # full extent (exempt from the pack rule)

    bytes_per_lane = (c_cache + 2 * c) * itemsize
    hw_t = _pick_hw_tile(hw, n, bytes_per_lane)
    grid = (n, hw // hw_t)
    step_bytes = bytes_per_lane * hw_t

    out_f = pl.pallas_call(
        functools.partial(_shift_kernel_fallback, fold=fold),
        out_shape=jax.ShapeDtypeStruct((n, c, hw), x.dtype),
        grid=grid,
        in_specs=[
            pl.BlockSpec((1, c_cache, hw_t), lambda i, j: (i, 0, j)),
            pl.BlockSpec((1, c, hw_t), lambda i, j: (i, 0, j)),
        ],
        out_specs=pl.BlockSpec((1, c, hw_t), lambda i, j: (i, 0, j)),
        compiler_params=_mosaic_params(step_bytes),
    )(cache_f, x_f)
    return out_f.reshape(x.shape)


def _shift_impl(cache, x, *, donate):
    assert x.ndim == 4, "online TemporalShift expects NCHW input"
    n, c, h, w = x.shape
    hw = h * w
    fold = c // 2
    if fold == 0:
        return x
    if c % 2 == 0 and (fold * hw) % _LANES == 0:
        return _call_aligned(cache, x, n, hw, fold, donate)
    # TODO(synk): small-C maps where fold*H*W is not a multiple of 128 still use
    # full-H*W blocks (short DMA rows); a ragged lane-dense flattening is possible
    # but needs masked edge handling.
    return _call_fallback(cache, x, n, c, hw, fold)


_temporal_shift_online = jax.jit(functools.partial(_shift_impl, donate=False))
_temporal_shift_online_donated = jax.jit(
    functools.partial(_shift_impl, donate=True), donate_argnums=(0,))


def _can_donate(x):
    n, c, h, w = x.shape
    return c >= 2 and c % 2 == 0 and ((c // 2) * h * w) % _LANES == 0


# ---------------------------------------------------------------------------
# Functional + stateful wrappers (forward semantics of the PyTorch module)
# ---------------------------------------------------------------------------

def temporal_shift_online_step(cache, x, *, donate_cache=False):
    """One step of TemporalShift(online=True).

    Returns (out, new_cache) with out = concat(cache[:, :C//2], x[:, C//2:], axis=1)
    and new_cache = x (kept by reference; JAX arrays are immutable).

    donate_cache=True additionally consumes `cache`'s buffer in place (output aliases
    it); only use when the caller no longer needs that buffer.
    """
    # TODO(synk): PyTorch's match_shape() cache resizing on input-shape change not implemented.
    assert cache.shape == x.shape and cache.dtype == x.dtype, "cache/x mismatch"
    if donate_cache and _can_donate(x):
        out = _temporal_shift_online_donated(cache, x)
    else:
        out = _temporal_shift_online(cache, x)
    return out, x


class TemporalShift:
    """Stateful wrapper mirroring the PyTorch module (online mode only).

    donate_cache=True enables the in-place fast path (~2x less HBM traffic): the
    previous frame's buffer (held as the cache) is donated to the kernel and its upper
    channel half is overwritten.  Ownership contract: a frame passed at step k (and the
    step-1 output, which is that same array) is invalidated when step k+1 runs.
    """

    # TODO(synk): offline_shift (5-D input, 3-way temporal shift) not implemented;
    # the module's default forward path is online_shift, which is what is kernelized.

    def __init__(self, online=True, donate_cache=False):
        assert online, "only online mode is implemented"
        self.donate_cache = donate_cache
        self.cache = None

    def __call__(self, x):
        if self.cache is None:
            # PyTorch initializes the cache to a clone of x, so the first output == x;
            # with immutable JAX arrays a reference is equivalent (and free).
            self.cache = x
            return x
        out, self.cache = temporal_shift_online_step(
            self.cache, x, donate_cache=self.donate_cache)
        return out


# ---------------------------------------------------------------------------
# Self-test
# ---------------------------------------------------------------------------

def _ref_np(cache_np, x_np):
    fold = x_np.shape[1] // 2
    return np.concatenate([cache_np[:, :fold], x_np[:, fold:]], axis=1)


def _f32(a):
    return np.asarray(a).astype(np.float32)


if __name__ == "__main__":
    # Donation that XLA cannot exploit only costs performance, never correctness;
    # silence the (benign) "donated buffers were not usable" hint if it appears.
    warnings.filterwarnings("ignore", message=".*[Dd]onat.*", category=UserWarning)

    key = jax.random.PRNGKey(0)
    ks = jax.random.split(key, 12)

    # 1) Small spec-sized shape (2, 4, 16, 16): lane-dense fast path, rows == full extent.
    x1 = jax.random.normal(ks[0], (2, 4, 16, 16), dtype=jnp.float32)
    x2 = jax.random.normal(ks[1], (2, 4, 16, 16), dtype=jnp.float32)
    ts = TemporalShift(online=True)
    o1 = jax.block_until_ready(ts(x1))
    o2 = jax.block_until_ready(ts(x2))
    assert o1.shape == x1.shape and o1.dtype == x1.dtype
    np.testing.assert_allclose(_f32(o1), _ref_np(_f32(x1), _f32(x1)))
    np.testing.assert_allclose(_f32(o2), _ref_np(_f32(x1), _f32(x2)))

    # 2) Tiled fast path with multiple pipelined grid steps: (2, 64, 32, 32) f32.
    a1 = jax.random.normal(ks[2], (2, 64, 32, 32), dtype=jnp.float32)
    a2 = jax.random.normal(ks[3], (2, 64, 32, 32), dtype=jnp.float32)
    ts_a = TemporalShift(online=True)
    _ = ts_a(a1)
    oa = jax.block_until_ready(ts_a(a2))
    np.testing.assert_allclose(_f32(oa), _ref_np(_f32(a1), _f32(a2)))

    # 3) bf16 fast path (sublane packing).
    b1 = jax.random.normal(ks[4], (2, 64, 32, 32), dtype=jnp.bfloat16)
    b2 = jax.random.normal(ks[5], (2, 64, 32, 32), dtype=jnp.bfloat16)
    ts_b = TemporalShift(online=True)
    _ = ts_b(b1)
    ob = jax.block_until_ready(ts_b(b2))
    np.testing.assert_allclose(_f32(ob), _ref_np(_f32(b1), _f32(b2)))

    # 4) Fallback path: odd channel count (2, 5, 16, 16).
    c1 = jax.random.normal(ks[6], (2, 5, 16, 16), dtype=jnp.float32)
    c2 = jax.random.normal(ks[7], (2, 5, 16, 16), dtype=jnp.float32)
    ts_c = TemporalShift(online=True)
    _ = ts_c(c1)
    oc = jax.block_until_ready(ts_c(c2))
    np.testing.assert_allclose(_f32(oc), _ref_np(_f32(c1), _f32(c2)))

    # 5) Fallback path: 7x7 feature map with small C (fold*H*W not a multiple of 128).
    d1 = jax.random.normal(ks[8], (2, 8, 7, 7), dtype=jnp.float32)
    d2 = jax.random.normal(ks[9], (2, 8, 7, 7), dtype=jnp.float32)
    ts_d = TemporalShift(online=True)
    _ = ts_d(d1)
    od = jax.block_until_ready(ts_d(d2))
    np.testing.assert_allclose(_f32(od), _ref_np(_f32(d1), _f32(d2)))

    # 6) Donated in-place path: (2, 16, 16, 16).  Snapshot everything to host first,
    #    since donated device buffers are consumed on the following step.
    e1 = jax.random.normal(ks[10], (2, 16, 16, 16), dtype=jnp.float32)
    e2 = jax.random.normal(ks[11], (2, 16, 16, 16), dtype=jnp.float32)
    e3 = jax.random.normal(ks[0], (2, 16, 16, 16), dtype=jnp.float32)
    e1_np, e2_np, e3_np = _f32(e1), _f32(e2), _f32(e3)
    ts_e = TemporalShift(online=True, donate_cache=True)
    oe1 = _f32(jax.block_until_ready(ts_e(e1)))
    oe2 = _f32(jax.block_until_ready(ts_e(e2)))
    oe3 = _f32(jax.block_until_ready(ts_e(e3)))
    np.testing.assert_allclose(oe1, e1_np)
    np.testing.assert_allclose(oe2, _ref_np(e1_np, e2_np))
    np.testing.assert_allclose(oe3, _ref_np(e2_np, e3_np))

    print("KERNEL_OK")
</pallas_src>

<mosaic_0001>
module attributes {stable_mosaic.version = 11 : i64} {
  func.func @_shift_kernel_aligned(%arg0: i32, %arg1: i32, %arg2: memref<1x1x4x128xf32, #tpu.memory_space<vmem>>, %arg3: memref<1x1x4x128xf32, #tpu.memory_space<vmem>>, %arg4: memref<1x2x4x128xf32, #tpu.memory_space<vmem>>) attributes {dimension_semantics = [#tpu.dimension_semantics<parallel>, #tpu.dimension_semantics<parallel>], iteration_bounds = array<i64: 2, 1>, scalar_prefetch = 0 : i64, scratch_operands = 0 : i64, tpu.core_type = #tpu.core_type<tc>, window_params = [{transform_indices = @transform_0, window_bounds = array<i64: 1, 1, 4, 128>}, {transform_indices = @transform_1, window_bounds = array<i64: 1, 1, 4, 128>}, {transform_indices = @transform_2, window_bounds = array<i64: 1, 2, 4, 128>}]} {
    %c0 = arith.constant 0 : index
    %c0_0 = arith.constant 0 : index
    %c0_1 = arith.constant 0 : index
    %c0_2 = arith.constant 0 : index
    %0 = vector.load %arg2[%c0, %c0_0, %c0_1, %c0_2] : memref<1x1x4x128xf32, #tpu.memory_space<vmem>>, vector<1x1x4x128xf32>
    %c0_3 = arith.constant 0 : index
    %c0_4 = arith.constant 0 : index
    %c0_5 = arith.constant 0 : index
    %c0_6 = arith.constant 0 : index
    %1 = vector.load %arg4[%c0_3, %c0_4, %c0_5, %c0_6] : memref<1x2x4x128xf32, #tpu.memory_space<vmem>>, vector<1x1x4x128xf32>
    tpu.vector_store %arg4[%c0_3, %c0_4, %c0_5, %c0_6], %0 {strides = array<i32>} : memref<1x2x4x128xf32, #tpu.memory_space<vmem>>, vector<1x1x4x128xf32>,
    %c0_7 = arith.constant 0 : index
    %c0_8 = arith.constant 0 : index
    %c0_9 = arith.constant 0 : index
    %c0_10 = arith.constant 0 : index
    %2 = vector.load %arg3[%c0_7, %c0_8, %c0_9, %c0_10] : memref<1x1x4x128xf32, #tpu.memory_space<vmem>>, vector<1x1x4x128xf32>
    %c0_11 = arith.constant 0 : index
    %c1 = arith.constant 1 : index
    %c0_12 = arith.constant 0 : index
    %c0_13 = arith.constant 0 : index
    %3 = vector.load %arg4[%c0_11, %c1, %c0_12, %c0_13] : memref<1x2x4x128xf32, #tpu.memory_space<vmem>>, vector<1x1x4x128xf32>
    tpu.vector_store %arg4[%c0_11, %c1, %c0_12, %c0_13], %2 {strides = array<i32>} : memref<1x2x4x128xf32, #tpu.memory_space<vmem>>, vector<1x1x4x128xf32>,
    return
  }
  func.func @transform_0(%arg0: i32, %arg1: i32) -> (i32, i32, i32, i32) {
    %c0_i32 = arith.constant 0 : i32
    %c0_i32_0 = arith.constant 0 : i32
    %c0_i32_1 = arith.constant 0 : i32
    return %arg0, %c0_i32, %arg1, %c0_i32_0 : i32, i32, i32, i32
  }
  func.func @transform_1(%arg0: i32, %arg1: i32) -> (i32, i32, i32, i32) {
    %c1_i32 = arith.constant 1 : i32
    %c0_i32 = arith.constant 0 : i32
    %c0_i32_0 = arith.constant 0 : i32
    return %arg0, %c1_i32, %arg1, %c0_i32 : i32, i32, i32, i32
  }
  func.func @transform_2(%arg0: i32, %arg1: i32) -> (i32, i32, i32, i32) {
    %c0_i32 = arith.constant 0 : i32
    %c0_i32_0 = arith.constant 0 : i32
    %c0_i32_1 = arith.constant 0 : i32
    return %arg0, %c0_i32, %arg1, %c0_i32_0 : i32, i32, i32, i32
  }
}

</mosaic_0001>

<llo_original>
// kernel: _shift_impl.1
$region0: #{_shift_impl.1}
  #allocation0 [shape = 'u32[]', space=smem, size = 0x4, offset = 0x4, fixed_abs, tag = 'smem constant byte address 0x4 - core index']
  #allocation1 [shape = 'u32[72,128]{1,0:T(1,128)}', space=vmem, size = 0x9000, scoped, tag = 'internal scratch']
  %s0 = inlined_call_operand.vmem [shape: f32[2,2,4,128], index: 0, kind: input, shape index: {}]
  %s1 = inlined_call_operand.vmem [shape: f32[2,2,4,128], index: 1, kind: input, shape index: {}]
  %s2 = inlined_call_operand.vmem [shape: f32[2,2,4,128], index: 2, kind: output, shape index: {}]
  %s3 = sld [smem:[#allocation0]]
  $region41: #{_shift_impl.1} parent=0
    _
  %s5 = ssub.s32 1, %s3
  %s6 = scalar_select 0, %s5, %s3
  loop: start=0, step=1, limit=4
  $region2: #{_shift_impl.1} parent=0 // loop_pre_header
    _
  $region3: #{_shift_impl.1} parent=0 // loop_header
    %s8 = sphi 0, %s12
    %p9 = scmp.ge.s32.totalorder %s8, 4
    %s15 = sphi 0, %s27
    %s16 = sphi 0, %s23
    %s17 = sphi 0, %s15
    %s18 = sphi 0, %s16
    %s19 = sphi 0, %s17
    %s20 = sphi 0, %s18
    %s32 = sphi 0, %s34
    %s35 = sphi 0, %s32
    %s36 = sphi 0, %s35
    %s52 = sphi 0, %s36
    %s60 = sphi 0, %s62
    %s63 = sphi 0, %s60
    %s64 = sphi 0, %s63
    %s80 = sphi 0, %s64
    %s88 = sphi 0, %s90
    %s91 = sphi 0, %s88
    %s92 = sphi 0, %s91
    %s108 = sphi 0, %s92
  $region4: #{_shift_impl.1} parent=0 // loop_header_branch
    %11 = sbr.rel (%p9) target = $region8
  $region5: #{_shift_impl.1} parent=0 // loop_body
    %s13 = ssub.s32 %s8, 1
    %s14 = ssub.s32 %s8, 2
    %s21 = sadd.s32 1, %s16
    %p22 = scmp.ge.s32.totalorder %s21, 1
    %s23 = scalar_select %p22, 0, %s21
    %s24 = sadd.s32 1, %s15
    %s25 = scalar_select %p22, %s24, %s15
    %p26 = scmp.ge.s32.totalorder %s25, 2
    %s27 = scalar_select %p26, 0, %s25
    %s28 = ssub.s32 %s15, %s27
    %s29 = ssub.s32 %s16, %s23
    %s30 = sor.u32 %s28, %s29
    %p31 = scmp.eq.s32.totalorder %s30, 0
    %s33 = sadd.s32 %s32, 1
    %s34 = scalar_select %p31, %s32, %s33
    %p37 = pneg %p31
    %p38 = scmp.eq.s32.totalorder %s8, 1
    %p39 = por %p37, %p38
    %p40 = scmp.ne.s32.totalorder %s32, %s35
    %p41 = scmp.eq.s32.totalorder %s8, 0
    %p42 = por %p40, %p41
    %p43 = scmp.ne.s32.totalorder %s32, %s35
    %p44 = scmp.eq.s32.totalorder %s13, 1
    %p45 = por %p43, %p44
    %p46 = scmp.ne.s32.totalorder %s35, %s36
    %p47 = scmp.eq.s32.totalorder %s13, 0
    %p48 = por %p46, %p47
    %p49 = scmp.ne.s32.totalorder %s35, %s36
    %p50 = scmp.eq.s32.totalorder %s14, 1
    %p51 = por %p49, %p50
    %p53 = scmp.ne.s32.totalorder %s36, %s52
    %p54 = scmp.eq.s32.totalorder %s14, 0
    %p55 = por %p53, %p54
    %s56 = ssub.s32 %s15, %s27
    %s57 = ssub.s32 %s16, %s23
    %s58 = sor.u32 %s56, %s57
    %p59 = scmp.eq.s32.totalorder %s58, 0
    %s61 = sadd.s32 %s60, 1
    %s62 = scalar_select %p59, %s60, %s61
    %p65 = pneg %p59
    %p66 = scmp.eq.s32.totalorder %s8, 1
    %p67 = por %p65, %p66
    %p68 = scmp.ne.s32.totalorder %s60, %s63
    %p69 = scmp.eq.s32.totalorder %s8, 0
    %p70 = por %p68, %p69
    %p71 = scmp.ne.s32.totalorder %s60, %s63
    %p72 = scmp.eq.s32.totalorder %s13, 1
    %p73 = por %p71, %p72
    %p74 = scmp.ne.s32.totalorder %s63, %s64
    %p75 = scmp.eq.s32.totalorder %s13, 0
    %p76 = por %p74, %p75
    %p77 = scmp.ne.s32.totalorder %s63, %s64
    %p78 = scmp.eq.s32.totalorder %s14, 1
    %p79 = por %p77, %p78
    %p81 = scmp.ne.s32.totalorder %s64, %s80
    %p82 = scmp.eq.s32.totalorder %s14, 0
    %p83 = por %p81, %p82
    %s84 = ssub.s32 %s15, %s27
    %s85 = ssub.s32 %s16, %s23
    %s86 = sor.u32 %s84, %s85
    %p87 = scmp.eq.s32.totalorder %s86, 0
    %s89 = sadd.s32 %s88, 1
    %s90 = scalar_select %p87, %s88, %s89
    %p93 = pneg %p87
    %p94 = scmp.eq.s32.totalorder %s8, 1
    %p95 = por %p93, %p94
    %p96 = scmp.ne.s32.totalorder %s88, %s91
    %p97 = scmp.eq.s32.totalorder %s8, 0
    %p98 = por %p96, %p97
    %p99 = scmp.ne.s32.totalorder %s88, %s91
    %p100 = scmp.eq.s32.totalorder %s13, 1
    %p101 = por %p99, %p100
    %p102 = scmp.ne.s32.totalorder %s91, %s92
    %p103 = scmp.eq.s32.totalorder %s13, 0
    %p104 = por %p102, %p103
    %p105 = scmp.ne.s32.totalorder %s91, %s92
    %p106 = scmp.eq.s32.totalorder %s14, 1
    %p107 = por %p105, %p106
    %p109 = scmp.ne.s32.totalorder %s92, %s108
    %p110 = scmp.eq.s32.totalorder %s14, 0
    %p111 = por %p109, %p110
    %p112 = scmp.le.s32.totalorder 1, %s8
    %p113 = scmp.lt.s32.totalorder %s8, 3
    %p114 = pnand %p112, %p113
    %p115 = pneg %p114
    // Predicated region
    $region9: #{_shift_impl.1} parent=5 // pred_check
      _
    $region10: #{_shift_impl.1} parent=5 // pred_check_branch
      %117 = sbr.rel (%p114) target = $region12
    $region11: #{_shift_impl.1} parent=5 // pred_region
      %s118 = ssub.s32 %s8, 1
    $region12: #{_shift_impl.1} parent=5 // pred_fallthru
      _
    %p119 = scmp.lt.s32.totalorder %s8, 2
    // Predicated region
    $region13: #{_shift_impl.1} parent=5 // pred_check
      %p120 = pneg %p119
    $region14: #{_shift_impl.1} parent=5 // pred_check_branch
      %122 = sbr.rel (%p120) target = $region16
    $region15: #{_shift_impl.1} parent=5 // pred_region
      // Predicated region
      $region17: #{_shift_impl.1} parent=15 // pred_check
        %p123 = pneg %p42
      $region18: #{_shift_impl.1} parent=15 // pred_check_branch
        %125 = sbr.rel (%p123) target = $region20
      $region19: #{_shift_impl.1} parent=15 // pred_region
        %p126 = scmp.lt.s32.totalorder %s15, 1
        %s127 = scalar_select %p126, %s15, 1
        %p128 = scmp.lt.s32.totalorder %s16, 0
        %s129 = scalar_select %p128, %s16, 0
        %s130 = smul.addr %s127, 2
        %s131 = sadd.s32 %s129, %s130
        %s132 = smul.addr %s131, 4
        %s133 = scalar_lea.vmem %s0, %s132
      $region20: #{_shift_impl.1} parent=15 // pred_fallthru
        _
      // Predicated region
      $region21: #{_shift_impl.1} parent=15 // pred_check
        %p134 = pneg %p70
      $region22: #{_shift_impl.1} parent=15 // pred_check_branch
        %136 = sbr.rel (%p134) target = $region24
      $region23: #{_shift_impl.1} parent=15 // pred_region
        %p137 = scmp.lt.s32.totalorder %s15, 1
        %s138 = scalar_select %p137, %s15, 1
        %p139 = scmp.lt.s32.totalorder %s16, 0
        %s140 = scalar_select %p139, %s16, 0
        %s141 = sadd.s32 %s140, 1
        %s142 = smul.addr %s138, 2
        %s143 = sadd.s32 %s141, %s142
        %s144 = smul.addr %s143, 4
        %s145 = scalar_lea.vmem %s1, %s144
      $region24: #{_shift_impl.1} parent=15 // pred_fallthru
        _
    $region16: #{_shift_impl.1} parent=5 // pred_fallthru
      _
    %p146 = scmp.le.s32.totalorder 1, %s8
    %p147 = scmp.lt.s32.totalorder %s8, 3
    %p148 = pnand %p146, %p147
    %p149 = pneg %p148
    // Predicated region
    $region25: #{_shift_impl.1} parent=5 // pred_check
      _
    $region26: #{_shift_impl.1} parent=5 // pred_check_branch
      %151 = sbr.rel (%p148) target = $region28
    $region27: #{_shift_impl.1} parent=5 // pred_region
      %s152 = ssub.s32 %s8, 1
      %p153 = scmp.lt.s32.totalorder %s17, 1
      %s154 = scalar_select %p153, %s17, 1
      %p155 = scmp.lt.s32.totalorder %s18, 0
      %s156 = scalar_select %p155, %s18, 0
      %s157 = smul.addr %s154, 2
      %s158 = sadd.s32 %s156, %s157
      %s159 = smul.addr %s158, 4
      %s160 = scalar_lea.vmem %s0, %s159
      %p161 = pneg %p48
      %p162 = pneg %p45
      %p163 = scmp.lt.s32.totalorder %s17, 1
      %s164 = scalar_select %p163, %s17, 1
      %p165 = scmp.lt.s32.totalorder %s18, 0
      %s166 = scalar_select %p165, %s18, 0
      %s167 = sadd.s32 %s166, 1
      %s168 = smul.addr %s164, 2
      %s169 = sadd.s32 %s167, %s168
      %s170 = smul.addr %s169, 4
      %s171 = scalar_lea.vmem %s1, %s170
      %p172 = pneg %p76
      %p173 = pneg %p73
      %p174 = pneg %p104
      %p175 = pneg %p101
      %p176 = scmp.lt.s32.totalorder %s17, 1
      %s177 = scalar_select %p176, %s17, 1
      %p178 = scmp.lt.s32.totalorder %s18, 0
      %s179 = scalar_select %p178, %s18, 0
      %s180 = smul.addr %s177, 2
      %s181 = sadd.s32 %s179, %s180
      %s182 = smul.addr %s181, 4
      %s183 = scalar_lea.vmem %s2, %s182
      %p184 = scmp.lt.s32.totalorder %s17, 1
      %s185 = scalar_select %p184, %s17, 1
      %p186 = scmp.lt.s32.totalorder %s18, 0
      %s187 = scalar_select %p186, %s18, 0
      %s188 = smul.addr %s185, 2
      %s189 = sadd.s32 %s187, %s188
      %s190 = smul.addr %s189, 4
      %s191 = scalar_lea.vmem %s0, %s190
      %p192 = scmp.lt.s32.totalorder %s17, 1
      %s193 = scalar_select %p192, %s17, 1
      %p194 = scmp.lt.s32.totalorder %s18, 0
      %s195 = scalar_select %p194, %s18, 0
      %s196 = sadd.s32 %s195, 1
      %s197 = smul.addr %s193, 2
      %s198 = sadd.s32 %s196, %s197
      %s199 = smul.addr %s198, 4
      %s200 = scalar_lea.vmem %s1, %s199
      %p201 = scmp.lt.s32.totalorder %s17, 1
      %s202 = scalar_select %p201, %s17, 1
      %p203 = scmp.lt.s32.totalorder %s18, 0
      %s204 = scalar_select %p203, %s18, 0
      %s205 = smul.addr %s202, 2
      %s206 = sadd.s32 %s204, %s205
      %s207 = smul.addr %s206, 4
      %s208 = scalar_lea.vmem %s2, %s207
      %v209 = vld [vmem:[%s191] sm:$0xf]
      %210 = vst [vmem:[%s208] sm:$0xf] %v209
      %v211 = vld [vmem:[%s200] sm:$0xf]
      %s212 = scalar_lea.vmem %s208, 4
      %213 = vst [vmem:[%s212] sm:$0xf] %v211
      %p214 = scmp.lt.s32.totalorder %s17, 1
      %s215 = scalar_select %p214, %s17, 1
      %p216 = scmp.lt.s32.totalorder %s18, 0
      %s217 = scalar_select %p216, %s18, 0
      %s218 = smul.addr %s215, 2
      %s219 = sadd.s32 %s217, %s218
      %s220 = smul.addr %s219, 4
      %s221 = scalar_lea.vmem %s2, %s220
      // Predicated region
      $region29: #{_shift_impl.1} parent=27 // pred_check
        %p222 = pneg %p101
      $region30: #{_shift_impl.1} parent=27 // pred_check_branch
        %224 = sbr.rel (%p222) target = $region32
      $region31: #{_shift_impl.1} parent=27 // pred_region
        _
      $region32: #{_shift_impl.1} parent=27 // pred_fallthru
        _
    $region28: #{_shift_impl.1} parent=5 // pred_fallthru
      _
    %p225 = scmp.le.s32.totalorder 2, %s8
    // Predicated region
    $region33: #{_shift_impl.1} parent=5 // pred_check
      %p226 = pneg %p225
    $region34: #{_shift_impl.1} parent=5 // pred_check_branch
      %228 = sbr.rel (%p226) target = $region36
    $region35: #{_shift_impl.1} parent=5 // pred_region
      %s229 = ssub.s32 %s8, 2
      // Predicated region
      $region37: #{_shift_impl.1} parent=35 // pred_check
        %p230 = pneg %p107
      $region38: #{_shift_impl.1} parent=35 // pred_check_branch
        %232 = sbr.rel (%p230) target = $region40
      $region39: #{_shift_impl.1} parent=35 // pred_region
        %p233 = scmp.lt.s32.totalorder %s19, 1
        %s234 = scalar_select %p233, %s19, 1
        %p235 = scmp.lt.s32.totalorder %s20, 0
        %s236 = scalar_select %p235, %s20, 0
        %s237 = smul.addr %s234, 2
        %s238 = sadd.s32 %s236, %s237
        %s239 = smul.addr %s238, 4
        %s240 = scalar_lea.vmem %s2, %s239
      $region40: #{_shift_impl.1} parent=35 // pred_fallthru
        _
    $region36: #{_shift_impl.1} parent=5 // pred_fallthru
      _
  $region6: #{_shift_impl.1} parent=0 // loop_footer
    %s12 = sadd.s32 1, %s8
  $region7: #{_shift_impl.1} parent=0 // loop_footer_branch
    %7 = sbr.rel target = $region3
  $region8: #{_shift_impl.1} parent=0 // loop_exit
    _

</llo_original>
